<compile_context>
chip_gen: v5e
topology: v5e:2x2
jax: 0.10.0
libtpu: 0.0.40
codegen_flags: <defaults>
</compile_context>

<pallas_src>
import jax
import jax.numpy as jnp
from jax.experimental import pallas as pl
from jax.experimental.pallas import tpu as pltpu  # noqa: F401  (TPU backend)


def quant_add_kernel(a_ref, b_ref, out_ref):
    # a_ref / b_ref: (1, N) lane-dense views of the flattened inputs.
    a = a_ref[...]
    b = b_ref[...]
    p = a + a
    q = b + b
    # Direct row-range stores: no sublane-axis concatenate, minimal vreg
    # pressure, minimal store count (helps v5e's single vst slot most).
    out_ref[0:1, :] = p
    out_ref[1:2, :] = q
    out_ref[2:3, :] = p + q


def quant_add_test2(a: jax.Array, b: jax.Array):
    assert a.shape == b.shape and a.dtype == b.dtype
    orig_shape = a.shape
    n = a.size  # 13 * 7 * 3 = 273

    # Wrapper-side reshape to a lane-dense 2D layout (last dim = full flat
    # extent).  Block shape == full array shape, so the (8, 128) divisibility
    # rule does not apply.  Row-major flatten preserves element order.
    a2 = a.reshape(1, n)
    b2 = b.reshape(1, n)

    flat_spec = pl.BlockSpec((1, n), lambda: (0, 0))
    out_spec = pl.BlockSpec((3, n), lambda: (0, 0))

    stacked = pl.pallas_call(
        quant_add_kernel,
        out_shape=jax.ShapeDtypeStruct((3, n), a.dtype),
        in_specs=[flat_spec, flat_spec],
        out_specs=out_spec,
        cost_estimate=pl.CostEstimate(
            flops=3 * n,                 # three elementwise adds
            transcendentals=0,
            bytes_accessed=5 * n * 4,    # 2 inputs + 3 outputs, f32
        ),
    )(a2, b2)

    p = stacked[0].reshape(orig_shape)
    q = stacked[1].reshape(orig_shape)
    r = stacked[2].reshape(orig_shape)
    return p, q, r


if __name__ == "__main__":
    key = jax.random.PRNGKey(0)
    ka, kb = jax.random.split(key)
    a = jax.random.normal(ka, (13, 7, 3), dtype=jnp.float32)
    b = jax.random.normal(kb, (13, 7, 3), dtype=jnp.float32)

    p, q, r = quant_add_test2(a, b)
    jax.block_until_ready((p, q, r))

    # Reference check against plain JAX semantics (matches PyTorch forward).
    p_ref = a + a
    q_ref = b + b
    r_ref = p_ref + q_ref
    assert jnp.allclose(p, p_ref), "p mismatch"
    assert jnp.allclose(q, q_ref), "q mismatch"
    assert jnp.allclose(r, r_ref), "r mismatch"

    print("KERNEL_OK")
</pallas_src>

<mosaic_0001>
module attributes {stable_mosaic.version = 11 : i64} {
  func.func @quant_add_kernel(%arg0: memref<1x273xf32, #tpu.memory_space<vmem>>, %arg1: memref<1x273xf32, #tpu.memory_space<vmem>>, %arg2: memref<3x273xf32, #tpu.memory_space<vmem>>) attributes {dimension_semantics = [], scalar_prefetch = 0 : i64, scratch_operands = 0 : i64, tpu.core_type = #tpu.core_type<tc>} {
    %c0 = arith.constant 0 : index
    %c0_0 = arith.constant 0 : index
    %0 = vector.load %arg0[%c0, %c0_0] : memref<1x273xf32, #tpu.memory_space<vmem>>, vector<1x273xf32>
    %c0_1 = arith.constant 0 : index
    %c0_2 = arith.constant 0 : index
    %1 = vector.load %arg1[%c0_1, %c0_2] : memref<1x273xf32, #tpu.memory_space<vmem>>, vector<1x273xf32>
    %2 = arith.addf %0, %0 : vector<1x273xf32>
    %3 = arith.addf %1, %1 : vector<1x273xf32>
    %c0_3 = arith.constant 0 : index
    %c0_4 = arith.constant 0 : index
    %4 = vector.load %arg2[%c0_3, %c0_4] : memref<3x273xf32, #tpu.memory_space<vmem>>, vector<1x273xf32>
    tpu.vector_store %arg2[%c0_3, %c0_4], %2 {strides = array<i32>} : memref<3x273xf32, #tpu.memory_space<vmem>>, vector<1x273xf32>,
    %c1 = arith.constant 1 : index
    %c0_5 = arith.constant 0 : index
    %5 = vector.load %arg2[%c1, %c0_5] : memref<3x273xf32, #tpu.memory_space<vmem>>, vector<1x273xf32>
    tpu.vector_store %arg2[%c1, %c0_5], %3 {strides = array<i32>} : memref<3x273xf32, #tpu.memory_space<vmem>>, vector<1x273xf32>,
    %6 = arith.addf %2, %3 : vector<1x273xf32>
    %c2 = arith.constant 2 : index
    %c0_6 = arith.constant 0 : index
    %7 = vector.load %arg2[%c2, %c0_6] : memref<3x273xf32, #tpu.memory_space<vmem>>, vector<1x273xf32>
    tpu.vector_store %arg2[%c2, %c0_6], %6 {strides = array<i32>} : memref<3x273xf32, #tpu.memory_space<vmem>>, vector<1x273xf32>,
    return
  }
}

</mosaic_0001>

<llo_original>
// kernel: tpu_custom_call.1
$region0: #{tpu_custom_call.1}
  #allocation0 [shape = 'u32[]', space=smem, size = 0x4, offset = 0x4, fixed_abs, tag = 'smem constant byte address 0x4 - core index']
  #allocation1 [shape = 'u32[72,128]{1,0:T(1,128)}', space=vmem, size = 0x9000, scoped, tag = 'internal scratch']
  %s0 = inlined_call_operand.hbm [shape: f32[1,273], index: 0, kind: input, shape index: {}]
  %s1 = inlined_call_operand.hbm [shape: f32[1,273], index: 1, kind: input, shape index: {}]
  %s2 = inlined_call_operand.hbm [shape: f32[3,273], index: 2, kind: output, shape index: {}]
  %s3 = sld [smem:[#allocation0]]
  $region26: #{tpu_custom_call.1} parent=0
    _
  %s5 = ssub.s32 1, %s3
  %s6 = scalar_select 0, %s5, %s3
  $region1: #{tpu_custom_call.1} parent=0
    #allocation2 [shape = 'u8[1536]{0}', space=vmem, size = 0x800, scoped, tag = 'input window, operand 0, single buffered']
    #allocation3 [shape = 's32[1]{0}', space=sflag, size = 0x4, scoped, tag = 'scoped memory for tpu_custom_call.1']
    #allocation4 [shape = 's32[1]{0}', space=sflag, size = 0x4, scoped, tag = 'scoped memory for tpu_custom_call.1']
    #allocation5 [shape = 'u8[1536]{0}', space=vmem, size = 0x800, scoped, tag = 'input window, operand 1, single buffered']
    #allocation6 [shape = 's32[1]{0}', space=sflag, size = 0x4, scoped, tag = 'scoped memory for tpu_custom_call.1']
    #allocation7 [shape = 'u8[6144]{0}', space=vmem, size = 0x1800, scoped, tag = 'output window, operand 0, single buffered']
    %7 = vsyncpa [#allocation3], 0
    %8 = vsyncpa [#allocation6], 0
    %9 = vsyncpa [#allocation4], 0
    // Predicated region
    $region2: #{tpu_custom_call.1} parent=1 // pred_check
      _
    $region3: #{tpu_custom_call.1} parent=1 // pred_check_branch
      %11 = sbr.rel (0) target = $region5
    $region4: #{tpu_custom_call.1} parent=1 // pred_region
      %13 = vsyncadd [#allocation3], 0
      %s15 = sshll.u32 %s0, 4
      %s16 = int_to_ptr.hbm [resolvable:$true] %s15
      %s17 = sshll.u32 [#allocation2], 4
      %s18 = int_to_ptr.vmem [resolvable:$true] %s17
      %20 = dma.hbm_to_vmem [thread:$0]  %s16, 48, %s18, [#allocation3]
    $region5: #{tpu_custom_call.1} parent=1 // pred_fallthru
      _
    // Predicated region
    $region6: #{tpu_custom_call.1} parent=1 // pred_check
      _
    $region7: #{tpu_custom_call.1} parent=1 // pred_check_branch
      %22 = sbr.rel (0) target = $region9
    $region8: #{tpu_custom_call.1} parent=1 // pred_region
      %24 = vsyncadd [#allocation6], 0
      %s26 = sshll.u32 %s1, 4
      %s27 = int_to_ptr.hbm [resolvable:$true] %s26
      %s28 = sshll.u32 [#allocation5], 4
      %s29 = int_to_ptr.vmem [resolvable:$true] %s28
      %31 = dma.hbm_to_vmem [thread:$0]  %s27, 48, %s29, [#allocation6]
    $region9: #{tpu_custom_call.1} parent=1 // pred_fallthru
      _
    // Predicated region
    $region10: #{tpu_custom_call.1} parent=1 // pred_check
      _
    $region11: #{tpu_custom_call.1} parent=1 // pred_check_branch
      %33 = sbr.rel (0) target = $region13
    $region12: #{tpu_custom_call.1} parent=1 // pred_region
      %35 = dma.done [#allocation3], 48
    $region13: #{tpu_custom_call.1} parent=1 // pred_fallthru
      _
    // Predicated region
    $region14: #{tpu_custom_call.1} parent=1 // pred_check
      _
    $region15: #{tpu_custom_call.1} parent=1 // pred_check_branch
      %37 = sbr.rel (0) target = $region17
    $region16: #{tpu_custom_call.1} parent=1 // pred_region
      %39 = dma.done [#allocation6], 48
    $region17: #{tpu_custom_call.1} parent=1 // pred_fallthru
      _
    %v40 = vld [vmem:[#allocation2] sm:$0x7]
    %v41 = vld [vmem:[#allocation5] sm:$0x7]
    %v42 = vadd.f32 %v40, %v40
    %v43 = vadd.f32 %v41, %v41
    %v44 = vlaneseq
    %vm45 = vcmp.ge.s32.totalorder %v44, 0
    %vm46 = vcmp.lt.s32.totalorder %v44, 273
    %vm47 = vmand %vm45, %vm46
    %48 = vst.msk [vmem:[#allocation7] ss:$4 sm:$0x7] %vm47, %v42
    %s49 = scalar_lea.vmem [#allocation7], 1
    %50 = vst.msk [vmem:[%s49] ss:$4 sm:$0x7] %vm47, %v43
    %v51 = vadd.f32 %v42, %v43
    %s52 = scalar_lea.vmem [#allocation7], 2
    %53 = vst.msk [vmem:[%s52] ss:$4 sm:$0x7] %vm47, %v51
    // Predicated region
    $region18: #{tpu_custom_call.1} parent=1 // pred_check
      _
    $region19: #{tpu_custom_call.1} parent=1 // pred_check_branch
      %55 = sbr.rel (0) target = $region21
    $region20: #{tpu_custom_call.1} parent=1 // pred_region
      %57 = vsyncadd [#allocation4], 0
      %s59 = sshll.u32 [#allocation7], 4
      %s60 = int_to_ptr.vmem [resolvable:$true] %s59
      %s61 = sshll.u32 %s2, 4
      %s62 = int_to_ptr.hbm [resolvable:$true] %s61
      %64 = dma.vmem_to_hbm [thread:$0]  %s60, 192, %s62, [#allocation4]
    $region21: #{tpu_custom_call.1} parent=1 // pred_fallthru
      _
    // Predicated region
    $region22: #{tpu_custom_call.1} parent=1 // pred_check
      _
    $region23: #{tpu_custom_call.1} parent=1 // pred_check_branch
      %66 = sbr.rel (0) target = $region25
    $region24: #{tpu_custom_call.1} parent=1 // pred_region
      %68 = dma.done [#allocation4], 192
    $region25: #{tpu_custom_call.1} parent=1 // pred_fallthru
      _
    %69 = vsyncpa [#allocation3], 1
    %70 = vsyncpa [#allocation6], 1
    %71 = vsyncpa [#allocation4], 1

</llo_original>
